<compile_context>
chip_gen: v7x
topology: tpu7x:2x2x1
jax: 0.10.0
libtpu: 0.0.40
codegen_flags: <defaults>
</compile_context>

<pallas_src>
import functools

import jax
import jax.numpy as jnp
from jax import lax
from jax.experimental import pallas as pl
from jax.experimental.pallas import tpu as pltpu


def _round_up(x, m):
    return ((x + m - 1) // m) * m


def _vmem_cap_bytes():
    """~80% of this generation's physical VMEM (fallback 128 MiB if the query fails)."""
    try:
        cap = int(pltpu.get_tpu_info().vmem_capacity_bytes)
    except Exception:
        cap = 128 * 1024 * 1024
    return int(cap * 0.8)


def _vmem_estimate(le_p, tld, d_p, h_p, return_att):
    """Rough VMEM footprint for the chosen block sizes (bf16 operands, f32 outputs)."""
    bf16, f32 = 2, 4
    blocks = (
        2 * tld * d_p * bf16          # decoder tile (double-buffered)
        + 2 * le_p * h_p * bf16       # f(enc) block
        + 2 * le_p * d_p * bf16       # encoder block
        + 2 * 8 * le_p * f32          # mask-bias block (sublane-padded)
        + 1 * d_p * h_p * bf16        # weight (single-buffered, grid-invariant)
        + 1 * 8 * h_p * f32           # bias   (single-buffered, grid-invariant)
        + 2 * tld * d_p * f32         # ctx output block
    )
    if return_att:
        blocks += 2 * tld * le_p * f32
    temps = tld * h_p * (f32 + bf16) + 4 * tld * le_p * f32   # t_dec + sim/exp/att temps
    return int(1.5 * (blocks + temps))                        # headroom


def _parikh_kernel(dec_ref, tenc_ref, enc_ref, maskb_ref, w_ref, b_ref, *out_refs,
                   return_att):
    if return_att:
        ctx_ref, att_ref = out_refs
    else:
        (ctx_ref,), att_ref = out_refs, None

    dec = dec_ref[0]                       # (TLd,  D_p) bf16
    t_enc = tenc_ref[0]                    # (Le_p, H_p) bf16 (precomputed f(enc))
    enc = enc_ref[0]                       # (Le_p, D_p) bf16
    mask_bias = maskb_ref[0]               # (1,   Le_p) f32 additive bias

    # Decoder projection f(dec) = ReLU(dec @ W + b); bf16 MXU operands, f32 accumulation.
    t_dec = jnp.maximum(
        jnp.dot(dec, w_ref[...], preferred_element_type=jnp.float32) + b_ref[...],
        0.0)                               # (TLd, H_p) f32

    # similarity = f(dec) @ f(enc)^T, contracting over H (no materialized transpose).
    sim = lax.dot_general(
        t_dec.astype(jnp.bfloat16), t_enc,
        (((1,), (1,)), ((), ())),
        preferred_element_type=jnp.float32)                    # (TLd, Le_p)
    sim = sim + mask_bias                                      # host-folded additive mask

    # numerically stable softmax over the encoder axis (exact divide: denom is (TLd,1)).
    m = jnp.max(sim, axis=-1, keepdims=True)
    e = jnp.exp(sim - m)
    att = e / jnp.sum(e, axis=-1, keepdims=True)               # (TLd, Le_p)

    if att_ref is not None:
        att_ref[0] = att

    ctx_ref[0] = jnp.dot(att.astype(jnp.bfloat16), enc,
                         preferred_element_type=jnp.float32)   # (TLd, D_p)


def parikh_attention(encoder_seq, decoder_seq, encoder_mask, weight_t, bias,
                     *, return_att=True, max_decoder_tile=512):
    """encoder_seq: (B, Le, D); decoder_seq: (B, Ld, D); encoder_mask: (B, Le);
    weight_t: (D, H) (already transposed vs torch); bias: (H,)."""
    B, Le, D = encoder_seq.shape
    _, Ld, _ = decoder_seq.shape
    H = weight_t.shape[1]

    # Lane-dense padding (last dims -> multiples of 128).
    Le_p = _round_up(Le, 128)
    D_p = _round_up(D, 128)
    H_p = _round_up(H, 128)

    # Decoder tile: multiples of 256 feed the 2x256x256 MXUs on v6e/v7x; small Ld stays small.
    if Ld >= 256:
        tld = min(_round_up(max_decoder_tile, 256), _round_up(Ld, 256))
        min_tld = 256
    else:
        tld = _round_up(Ld, 8)
        min_tld = 8

    # Generation-aware VMEM budget: shrink the decoder tile instead of silently clamping.
    cap = _vmem_cap_bytes()
    while _vmem_estimate(Le_p, tld, D_p, H_p, return_att) > cap and tld > min_tld:
        tld = max(min_tld, _round_up(tld // 2, min_tld))
    # TODO(synk): for very long encoders where the resident (Le_p,D_p)+(Le_p,H_p) blocks alone
    # exceed the cap (esp. v7x's 64 MiB), add an Le grid axis with online-softmax accumulation.
    vmem_bytes = int(min(max(_vmem_estimate(Le_p, tld, D_p, H_p, return_att),
                             32 * 1024 * 1024), cap))

    Ld_p = _round_up(Ld, tld)

    # bf16 MXU operands cast once on the host (halves DMA bytes and VMEM residency).
    enc_p = jnp.pad(encoder_seq.astype(jnp.bfloat16),
                    ((0, 0), (0, Le_p - Le), (0, D_p - D)))
    dec_p = jnp.pad(decoder_seq.astype(jnp.bfloat16),
                    ((0, 0), (0, Ld_p - Ld), (0, D_p - D)))
    w_p = jnp.pad(weight_t.astype(jnp.bfloat16), ((0, D_p - D), (0, H_p - H)))
    b_p = jnp.pad(bias.astype(jnp.float32), ((0, H_p - H),)).reshape(1, H_p)

    # Host-folded additive mask: (mask-1)*1e4 on real keys, -1e30 on padded keys so that a
    # fully-masked row still normalizes over the real Le keys only (matches the reference).
    mask_bias = (encoder_mask.astype(jnp.float32) - 1.0) * 10000.0
    mask_bias = jnp.pad(mask_bias, ((0, 0), (0, Le_p - Le)),
                        constant_values=-1e30).reshape(B, 1, Le_p)

    # f(enc) precomputed as an XLA bf16 matmul with f32 accumulation: removes the serialized
    # per-batch projection bubble and the VMEM scratch; pipeline prefetches it like any operand.
    t_enc = jnp.maximum(
        jnp.dot(enc_p, w_p, preferred_element_type=jnp.float32) + b_p, 0.0
    ).astype(jnp.bfloat16)                                      # (B, Le_p, H_p)

    grid = (B, Ld_p // tld)

    ctx_shape = jax.ShapeDtypeStruct((B, Ld_p, D_p), jnp.float32)
    ctx_spec = pl.BlockSpec((1, tld, D_p), lambda b, j: (b, j, 0))
    if return_att:
        out_shape = (ctx_shape, jax.ShapeDtypeStruct((B, Ld_p, Le_p), jnp.float32))
        out_specs = (ctx_spec, pl.BlockSpec((1, tld, Le_p), lambda b, j: (b, j, 0)))
    else:
        out_shape = ctx_shape
        out_specs = ctx_spec

    outs = pl.pallas_call(
        functools.partial(_parikh_kernel, return_att=return_att),
        out_shape=out_shape,
        grid=grid,
        in_specs=[
            pl.BlockSpec((1, tld, D_p), lambda b, j: (b, j, 0)),    # decoder tile (bf16)
            pl.BlockSpec((1, Le_p, H_p), lambda b, j: (b, 0, 0)),   # f(enc)       (bf16)
            pl.BlockSpec((1, Le_p, D_p), lambda b, j: (b, 0, 0)),   # encoder      (bf16)
            pl.BlockSpec((1, 1, Le_p), lambda b, j: (b, 0, 0)),     # mask bias    (f32)
            pl.BlockSpec((D_p, H_p), lambda b, j: (0, 0),           # weight: grid-invariant,
                         pipeline_mode=pl.Buffered(1)),             #   single-buffered
            pl.BlockSpec((1, H_p), lambda b, j: (0, 0),             # bias: grid-invariant,
                         pipeline_mode=pl.Buffered(1)),             #   single-buffered
        ],
        out_specs=out_specs,
        compiler_params=pltpu.CompilerParams(
            dimension_semantics=("parallel", "parallel"),
            vmem_limit_bytes=vmem_bytes,
        ),
    )(dec_p, t_enc, enc_p, mask_bias, w_p, b_p)

    if return_att:
        ctx_p, att_p = outs
        return ctx_p[:, :Ld, :D], att_p[:, :Ld, :Le]
    return outs[:, :Ld, :D]


def reference(encoder_seq, decoder_seq, encoder_mask, weight_t, bias):
    t_dec = jnp.maximum(decoder_seq @ weight_t + bias, 0.0)
    t_enc = jnp.maximum(encoder_seq @ weight_t + bias, 0.0)
    sim = jnp.einsum("bqh,bkh->bqk", t_dec, t_enc)
    sim = sim + (1.0 - encoder_mask[:, None, :]) * -10000.0
    att = jax.nn.softmax(sim, axis=-1)
    ctx = jnp.einsum("bqk,bkd->bqd", att, encoder_seq)
    return ctx, att


if __name__ == "__main__":
    B, Le, Ld, D, H = 2, 16, 8, 16, 32

    key = jax.random.PRNGKey(0)
    k_enc, k_dec, k_w, k_b = jax.random.split(key, 4)

    encoder_seq = jax.random.normal(k_enc, (B, Le, D), dtype=jnp.float32)
    decoder_seq = jax.random.normal(k_dec, (B, Ld, D), dtype=jnp.float32)

    # deterministic parameter init (shapes from nn.Linear(input_size=D, hidden_size=H))
    bound = 1.0 / (D ** 0.5)
    weight_t = jax.random.uniform(k_w, (D, H), minval=-bound, maxval=bound, dtype=jnp.float32)
    bias = jax.random.uniform(k_b, (H,), minval=-bound, maxval=bound, dtype=jnp.float32)

    # mask out the last 4 encoder positions of batch element 1
    encoder_mask = jnp.ones((B, Le), dtype=jnp.float32)
    encoder_mask = encoder_mask.at[1, -4:].set(0.0)

    ctx, att = parikh_attention(encoder_seq, decoder_seq, encoder_mask, weight_t, bias)
    jax.block_until_ready((ctx, att))

    ref_ctx, ref_att = reference(encoder_seq, decoder_seq, encoder_mask, weight_t, bias)

    # bf16 MXU operands (host-cast inputs/weights) -> loosened tolerances vs f32 reference.
    assert ctx.shape == ref_ctx.shape and att.shape == ref_att.shape
    assert jnp.allclose(att, ref_att, atol=3e-2, rtol=3e-2), float(jnp.abs(att - ref_att).max())
    assert jnp.allclose(ctx, ref_ctx, atol=6e-2, rtol=6e-2), float(jnp.abs(ctx - ref_ctx).max())

    # ctx-only variant (skips the (B, Ld, Le) attention-matrix writeback entirely).
    ctx_only = parikh_attention(encoder_seq, decoder_seq, encoder_mask, weight_t, bias,
                                return_att=False)
    jax.block_until_ready(ctx_only)
    assert jnp.allclose(ctx_only, ref_ctx, atol=6e-2, rtol=6e-2)

    print("KERNEL_OK")
</pallas_src>

<mosaic_0001>
module attributes {stable_mosaic.version = 11 : i64} {
  func.func @_parikh_kernel(%arg0: i32, %arg1: i32, %arg2: memref<1x8x128xbf16, #tpu.memory_space<vmem>>, %arg3: memref<1x128x128xbf16, #tpu.memory_space<vmem>>, %arg4: memref<1x128x128xbf16, #tpu.memory_space<vmem>>, %arg5: memref<1x1x128xf32, #tpu.memory_space<vmem>>, %arg6: memref<128x128xbf16, #tpu.memory_space<vmem>>, %arg7: memref<1x128xf32, #tpu.memory_space<vmem>>, %arg8: memref<1x8x128xf32, #tpu.memory_space<vmem>>, %arg9: memref<1x8x128xf32, #tpu.memory_space<vmem>>) attributes {dimension_semantics = [#tpu.dimension_semantics<parallel>, #tpu.dimension_semantics<parallel>], iteration_bounds = array<i64: 2, 1>, scalar_prefetch = 0 : i64, scratch_operands = 0 : i64, tpu.core_type = #tpu.core_type<tc>, window_params = [{transform_indices = @transform_0, window_bounds = array<i64: 1, 8, 128>}, {transform_indices = @transform_1, window_bounds = array<i64: 1, 128, 128>}, {transform_indices = @transform_2, window_bounds = array<i64: 1, 128, 128>}, {transform_indices = @transform_3, window_bounds = array<i64: 1, 1, 128>}, {pipeline_mode = #tpu.pipeline_mode<synchronous>, transform_indices = @transform_4, window_bounds = array<i64: 128, 128>}, {pipeline_mode = #tpu.pipeline_mode<synchronous>, transform_indices = @transform_5, window_bounds = array<i64: 1, 128>}, {transform_indices = @transform_6, window_bounds = array<i64: 1, 8, 128>}, {transform_indices = @transform_7, window_bounds = array<i64: 1, 8, 128>}]} {
    %c0 = arith.constant 0 : index
    %c0_0 = arith.constant 0 : index
    %c0_1 = arith.constant 0 : index
    %0 = vector.load %arg2[%c0, %c0_0, %c0_1] : memref<1x8x128xbf16, #tpu.memory_space<vmem>>, vector<1x8x128xbf16>
    %1 = vector.shape_cast %0 : vector<1x8x128xbf16> to vector<8x128xbf16>
    %c0_2 = arith.constant 0 : index
    %c0_3 = arith.constant 0 : index
    %c0_4 = arith.constant 0 : index
    %2 = vector.load %arg3[%c0_2, %c0_3, %c0_4] : memref<1x128x128xbf16, #tpu.memory_space<vmem>>, vector<1x128x128xbf16>
    %3 = vector.shape_cast %2 : vector<1x128x128xbf16> to vector<128x128xbf16>
    %c0_5 = arith.constant 0 : index
    %c0_6 = arith.constant 0 : index
    %c0_7 = arith.constant 0 : index
    %4 = vector.load %arg4[%c0_5, %c0_6, %c0_7] : memref<1x128x128xbf16, #tpu.memory_space<vmem>>, vector<1x128x128xbf16>
    %5 = vector.shape_cast %4 : vector<1x128x128xbf16> to vector<128x128xbf16>
    %c0_8 = arith.constant 0 : index
    %c0_9 = arith.constant 0 : index
    %c0_10 = arith.constant 0 : index
    %6 = vector.load %arg5[%c0_8, %c0_9, %c0_10] : memref<1x1x128xf32, #tpu.memory_space<vmem>>, vector<1x1x128xf32>
    %7 = vector.shape_cast %6 : vector<1x1x128xf32> to vector<1x128xf32>
    %c0_11 = arith.constant 0 : index
    %c0_12 = arith.constant 0 : index
    %8 = vector.load %arg6[%c0_11, %c0_12] : memref<128x128xbf16, #tpu.memory_space<vmem>>, vector<128x128xbf16>
    %cst = arith.constant dense<0.000000e+00> : vector<8x128xf32>
    %9 = tpu.matmul %1, %8, %cst {dimension_numbers = #tpu.dot_dimension_numbers<[1], [0], [0], [1], [0, 0, 1, 1], [], []>} : vector<8x128xbf16>, vector<128x128xbf16>, vector<8x128xf32> -> vector<8x128xf32>
    %c0_13 = arith.constant 0 : index
    %c0_14 = arith.constant 0 : index
    %10 = vector.load %arg7[%c0_13, %c0_14] : memref<1x128xf32, #tpu.memory_space<vmem>>, vector<1x128xf32>
    %11 = vector.broadcast %10 : vector<1x128xf32> to vector<8x128xf32>
    %12 = arith.addf %9, %11 : vector<8x128xf32>
    %cst_15 = arith.constant 0.000000e+00 : f32
    %13 = vector.broadcast %cst_15 : f32 to vector<8x128xf32>
    %14 = arith.maximumf %12, %13 : vector<8x128xf32>
    %15 = arith.truncf %14 : vector<8x128xf32> to vector<8x128xbf16>
    %cst_16 = arith.constant dense<0.000000e+00> : vector<8x128xf32>
    %16 = tpu.matmul %15, %3, %cst_16 {dimension_numbers = #tpu.dot_dimension_numbers<[1], [1], [0], [0], [0, 0, 1, 0], [], []>} : vector<8x128xbf16>, vector<128x128xbf16>, vector<8x128xf32> -> vector<8x128xf32>
    %17 = vector.broadcast %7 : vector<1x128xf32> to vector<8x128xf32>
    %18 = arith.addf %16, %17 : vector<8x128xf32>
    %cst_17 = arith.constant dense<0xFF800000> : vector<8xf32>
    %19 = vector.multi_reduction <maximumf>, %18, %cst_17 [1] : vector<8x128xf32> to vector<8xf32>
    %20 = vector.shape_cast %19 : vector<8xf32> to vector<8x1xf32>
    %21 = vector.broadcast %20 : vector<8x1xf32> to vector<8x128xf32>
    %22 = arith.subf %18, %21 : vector<8x128xf32>
    %23 = math.exp %22 : vector<8x128xf32>
    %cst_18 = arith.constant dense<0.000000e+00> : vector<8xf32>
    %24 = vector.multi_reduction <add>, %23, %cst_18 [1] : vector<8x128xf32> to vector<8xf32>
    %25 = vector.shape_cast %24 : vector<8xf32> to vector<8x1xf32>
    %26 = vector.broadcast %25 : vector<8x1xf32> to vector<8x128xf32>
    %27 = arith.divf %23, %26 : vector<8x128xf32>
    %c0_19 = arith.constant 0 : index
    %c0_20 = arith.constant 0 : index
    %c0_21 = arith.constant 0 : index
    %28 = vector.load %arg9[%c0_19, %c0_20, %c0_21] : memref<1x8x128xf32, #tpu.memory_space<vmem>>, vector<1x8x128xf32>
    %29 = vector.shape_cast %28 : vector<1x8x128xf32> to vector<8x128xf32>
    %30 = vector.shape_cast %27 : vector<8x128xf32> to vector<1x8x128xf32>
    tpu.vector_store %arg9[%c0_19, %c0_20, %c0_21], %30 {strides = array<i32>} : memref<1x8x128xf32, #tpu.memory_space<vmem>>, vector<1x8x128xf32>,
    %31 = arith.truncf %27 : vector<8x128xf32> to vector<8x128xbf16>
    %cst_22 = arith.constant dense<0.000000e+00> : vector<8x128xf32>
    %32 = tpu.matmul %31, %5, %cst_22 {dimension_numbers = #tpu.dot_dimension_numbers<[1], [0], [0], [1], [0, 0, 1, 1], [], []>} : vector<8x128xbf16>, vector<128x128xbf16>, vector<8x128xf32> -> vector<8x128xf32>
    %c0_23 = arith.constant 0 : index
    %c0_24 = arith.constant 0 : index
    %c0_25 = arith.constant 0 : index
    %33 = vector.load %arg8[%c0_23, %c0_24, %c0_25] : memref<1x8x128xf32, #tpu.memory_space<vmem>>, vector<1x8x128xf32>
    %34 = vector.shape_cast %33 : vector<1x8x128xf32> to vector<8x128xf32>
    %35 = vector.shape_cast %32 : vector<8x128xf32> to vector<1x8x128xf32>
    tpu.vector_store %arg8[%c0_23, %c0_24, %c0_25], %35 {strides = array<i32>} : memref<1x8x128xf32, #tpu.memory_space<vmem>>, vector<1x8x128xf32>,
    return
  }
  func.func @transform_0(%arg0: i32, %arg1: i32) -> (i32, i32, i32) {
    %c0_i32 = arith.constant 0 : i32
    %c0_i32_0 = arith.constant 0 : i32
    return %arg0, %arg1, %c0_i32 : i32, i32, i32
  }
  func.func @transform_1(%arg0: i32, %arg1: i32) -> (i32, i32, i32) {
    %c0_i32 = arith.constant 0 : i32
    %c0_i32_0 = arith.constant 0 : i32
    %c0_i32_1 = arith.constant 0 : i32
    return %arg0, %c0_i32, %c0_i32_0 : i32, i32, i32
  }
  func.func @transform_2(%arg0: i32, %arg1: i32) -> (i32, i32, i32) {
    %c0_i32 = arith.constant 0 : i32
    %c0_i32_0 = arith.constant 0 : i32
    %c0_i32_1 = arith.constant 0 : i32
    return %arg0, %c0_i32, %c0_i32_0 : i32, i32, i32
  }
  func.func @transform_3(%arg0: i32, %arg1: i32) -> (i32, i32, i32) {
    %c0_i32 = arith.constant 0 : i32
    %c0_i32_0 = arith.constant 0 : i32
    %c0_i32_1 = arith.constant 0 : i32
    return %arg0, %c0_i32, %c0_i32_0 : i32, i32, i32
  }
  func.func @transform_4(%arg0: i32, %arg1: i32) -> (i32, i32) {
    %c0_i32 = arith.constant 0 : i32
    %c0_i32_0 = arith.constant 0 : i32
    %c0_i32_1 = arith.constant 0 : i32
    return %c0_i32, %c0_i32_0 : i32, i32
  }
  func.func @transform_5(%arg0: i32, %arg1: i32) -> (i32, i32) {
    %c0_i32 = arith.constant 0 : i32
    %c0_i32_0 = arith.constant 0 : i32
    %c0_i32_1 = arith.constant 0 : i32
    return %c0_i32, %c0_i32_0 : i32, i32
  }
  func.func @transform_6(%arg0: i32, %arg1: i32) -> (i32, i32, i32) {
    %c0_i32 = arith.constant 0 : i32
    %c0_i32_0 = arith.constant 0 : i32
    return %arg0, %arg1, %c0_i32 : i32, i32, i32
  }
  func.func @transform_7(%arg0: i32, %arg1: i32) -> (i32, i32, i32) {
    %c0_i32 = arith.constant 0 : i32
    %c0_i32_0 = arith.constant 0 : i32
    return %arg0, %arg1, %c0_i32 : i32, i32, i32
  }
}

</mosaic_0001>

<llo_original>
// kernel: tpu_custom_call.1
$region0: #{tpu_custom_call.1}
  #allocation0 [shape = 'u32[]', space=smem, size = 0x4, offset = 0x4, fixed_abs, tag = 'smem constant byte address 0x4 - core index']
  #allocation1 [shape = 'u32[144,128]{1,0:T(1,128)}', space=vmem, size = 0x12000, scoped, tag = 'internal scratch']
  %s0 = inlined_call_operand.hbm [shape: bf16[2,8,128], index: 0, kind: input, shape index: {}]
  %s1 = inlined_call_operand.hbm [shape: bf16[2,128,128], index: 1, kind: input, shape index: {}]
  %s2 = inlined_call_operand.hbm [shape: bf16[2,128,128], index: 2, kind: input, shape index: {}]
  %s3 = inlined_call_operand.vmem [shape: f32[2,1,128], index: 3, kind: input, shape index: {}]
  %s4 = inlined_call_operand.hbm [shape: bf16[128,128], index: 4, kind: input, shape index: {}]
  %s5 = inlined_call_operand.vmem [shape: f32[1,128], index: 5, kind: input, shape index: {}]
  %s6 = inlined_call_operand.hbm [shape: f32[2,8,128], index: 6, kind: output, shape index: {0}]
  %s7 = inlined_call_operand.hbm [shape: f32[2,8,128], index: 7, kind: output, shape index: {1}]
  %8 = xla_tuple %s6, %s7
  %s9 = sld [smem:[#allocation0]]
  $region81: #{tpu_custom_call.1} parent=0
    _
  %s11 = ssub.s32 1, %s9
  %s12 = scalar_select 0, %s11, %s9
  $region1: #{tpu_custom_call.1} parent=0
    #allocation2 [shape = 'u8[4096]{0}', space=vmem, size = 0x1000, scoped, tag = 'input window, operand 0']
    #allocation3 [shape = 's32[2]{0}', space=sflag, size = 0x8, scoped, tag = 'scoped memory for tpu_custom_call.1']
    #allocation4 [shape = 's32[2]{0}', space=sflag, size = 0x8, scoped, tag = 'scoped memory for tpu_custom_call.1']
    #allocation5 [shape = 'u8[65536]{0}', space=vmem, size = 0x10000, scoped, tag = 'input window, operand 1']
    #allocation6 [shape = 's32[2]{0}', space=sflag, size = 0x8, scoped, tag = 'scoped memory for tpu_custom_call.1']
    #allocation7 [shape = 'u8[65536]{0}', space=vmem, size = 0x10000, scoped, tag = 'input window, operand 2']
    #allocation8 [shape = 'u8[32768]{0}', space=vmem, size = 0x8000, scoped, tag = 'input window, operand 4, single buffered']
    #allocation9 [shape = 's32[1]{0}', space=sflag, size = 0x4, scoped, tag = 'scoped memory for tpu_custom_call.1']
    #allocation10 [shape = 'u8[8192]{0}', space=vmem, size = 0x2000, scoped, tag = 'output window, operand 0']
    #allocation11 [shape = 'u8[8192]{0}', space=vmem, size = 0x2000, scoped, tag = 'output window, operand 1']
    #allocation12 [shape = 's32[2]{0}', space=sflag, size = 0x8, scoped, tag = 'scoped memory for tpu_custom_call.1']
    %13 = vsyncpa [#allocation3], 0
    %s14 = scalar_lea.sflag [#allocation3], 1
    %15 = vsyncpa %s14, 0
    %16 = vsyncpa [#allocation6], 0
    %s17 = scalar_lea.sflag [#allocation6], 1
    %18 = vsyncpa %s17, 0
    %19 = vsyncpa [#allocation9], 0
    %20 = vsyncpa [#allocation4], 0
    %s21 = scalar_lea.sflag [#allocation4], 1
    %22 = vsyncpa %s21, 0
    %23 = vsyncpa [#allocation12], 0
    %s24 = scalar_lea.sflag [#allocation12], 1
    %25 = vsyncpa %s24, 0
    loop: start=0, step=1, limit=4
    $region2: #{tpu_custom_call.1} parent=1 // loop_pre_header
      _
    $region3: #{tpu_custom_call.1} parent=1 // loop_header
      %s27 = sphi 0, %s31
      %p28 = scmp.ge.s32.totalorder %s27, 4
      %s34 = sphi 0, %s46
      %s35 = sphi 0, %s42
      %s36 = sphi 0, %s34
      %s37 = sphi 0, %s35
      %s38 = sphi 0, %s36
      %s39 = sphi 0, %s37
      %s51 = sphi 0, %s53
      %s54 = sphi 0, %s51
      %s55 = sphi 0, %s54
      %s71 = sphi 0, %s55
      %s77 = sphi 0, %s79
      %s80 = sphi 0, %s77
      %s81 = sphi 0, %s80
      %s97 = sphi 0, %s81
      %s103 = sphi 0, %s105
      %s106 = sphi 0, %s103
      %s107 = sphi 0, %s106
      %s123 = sphi 0, %s107
      %s129 = sphi 0, %s131
      %s132 = sphi 0, %s129
      %s133 = sphi 0, %s132
      %s149 = sphi 0, %s133
      %s153 = sphi 0, %s153
      %s155 = sphi 0, %s153
      %s156 = sphi 0, %s155
      %s170 = sphi 0, %s156
      %s174 = sphi 0, %s174
      %s176 = sphi 0, %s174
      %s177 = sphi 0, %s176
      %s191 = sphi 0, %s177
      %s199 = sphi 0, %s201
      %s202 = sphi 0, %s199
      %s203 = sphi 0, %s202
      %s219 = sphi 0, %s203
      %s227 = sphi 0, %s229
      %s230 = sphi 0, %s227
      %s231 = sphi 0, %s230
      %s247 = sphi 0, %s231
    $region4: #{tpu_custom_call.1} parent=1 // loop_header_branch
      %30 = sbr.rel (%p28) target = $region8
    $region5: #{tpu_custom_call.1} parent=1 // loop_body
      %s32 = ssub.s32 %s27, 1
      %s33 = ssub.s32 %s27, 2
      %s40 = sadd.s32 1, %s35
      %p41 = scmp.ge.s32.totalorder %s40, 1
      %s42 = scalar_select %p41, 0, %s40
      %s43 = sadd.s32 1, %s34
      %s44 = scalar_select %p41, %s43, %s34
      %p45 = scmp.ge.s32.totalorder %s44, 2
      %s46 = scalar_select %p45, 0, %s44
      %s47 = ssub.s32 %s34, %s46
      %s48 = ssub.s32 %s35, %s42
      %s49 = sor.u32 %s47, %s48
      %p50 = scmp.eq.s32.totalorder %s49, 0
      %s52 = sadd.s32 %s51, 1
      %s53 = scalar_select %p50, %s51, %s52
      %p56 = pneg %p50
      %p57 = scmp.eq.s32.totalorder %s27, 1
      %p58 = por %p56, %p57
      %p59 = scmp.ne.s32.totalorder %s51, %s54
      %p60 = scmp.eq.s32.totalorder %s27, 0
      %p61 = por %p59, %p60
      %p62 = scmp.ne.s32.totalorder %s51, %s54
      %p63 = scmp.eq.s32.totalorder %s32, 1
      %p64 = por %p62, %p63
      %p65 = scmp.ne.s32.totalorder %s54, %s55
      %p66 = scmp.eq.s32.totalorder %s32, 0
      %p67 = por %p65, %p66
      %p68 = scmp.ne.s32.totalorder %s54, %s55
      %p69 = scmp.eq.s32.totalorder %s33, 1
      %p70 = por %p68, %p69
      %p72 = scmp.ne.s32.totalorder %s55, %s71
      %p73 = scmp.eq.s32.totalorder %s33, 0
      %p74 = por %p72, %p73
      %s75 = ssub.s32 %s34, %s46
      %p76 = scmp.eq.s32.totalorder %s75, 0
      %s78 = sadd.s32 %s77, 1
      %s79 = scalar_select %p76, %s77, %s78
      %p82 = pneg %p76
      %p83 = scmp.eq.s32.totalorder %s27, 1
      %p84 = por %p82, %p83
      %p85 = scmp.ne.s32.totalorder %s77, %s80
      %p86 = scmp.eq.s32.totalorder %s27, 0
      %p87 = por %p85, %p86
      %p88 = scmp.ne.s32.totalorder %s77, %s80
      %p89 = scmp.eq.s32.totalorder %s32, 1
      %p90 = por %p88, %p89
      %p91 = scmp.ne.s32.totalorder %s80, %s81
      %p92 = scmp.eq.s32.totalorder %s32, 0
      %p93 = por %p91, %p92
      %p94 = scmp.ne.s32.totalorder %s80, %s81
      %p95 = scmp.eq.s32.totalorder %s33, 1
      %p96 = por %p94, %p95
      %p98 = scmp.ne.s32.totalorder %s81, %s97
      %p99 = scmp.eq.s32.totalorder %s33, 0
      %p100 = por %p98, %p99
      %s101 = ssub.s32 %s34, %s46
      %p102 = scmp.eq.s32.totalorder %s101, 0
      %s104 = sadd.s32 %s103, 1
      %s105 = scalar_select %p102, %s103, %s104
      %p108 = pneg %p102
      %p109 = scmp.eq.s32.totalorder %s27, 1
      %p110 = por %p108, %p109
      %p111 = scmp.ne.s32.totalorder %s103, %s106
      %p112 = scmp.eq.s32.totalorder %s27, 0
      %p113 = por %p111, %p112
      %p114 = scmp.ne.s32.totalorder %s103, %s106
      %p115 = scmp.eq.s32.totalorder %s32, 1
      %p116 = por %p114, %p115
      %p117 = scmp.ne.s32.totalorder %s106, %s107
      %p118 = scmp.eq.s32.totalorder %s32, 0
      %p119 = por %p117, %p118
      %p120 = scmp.ne.s32.totalorder %s106, %s107
      %p121 = scmp.eq.s32.totalorder %s33, 1
      %p122 = por %p120, %p121
      %p124 = scmp.ne.s32.totalorder %s107, %s123
      %p125 = scmp.eq.s32.totalorder %s33, 0
      %p126 = por %p124, %p125
      %s127 = ssub.s32 %s34, %s46
      %p128 = scmp.eq.s32.totalorder %s127, 0
      %s130 = sadd.s32 %s129, 1
      %s131 = scalar_select %p128, %s129, %s130
      %p134 = pneg %p128
      %p135 = scmp.eq.s32.totalorder %s27, 1
      %p136 = por %p134, %p135
      %p137 = scmp.ne.s32.totalorder %s129, %s132
      %p138 = scmp.eq.s32.totalorder %s27, 0
      %p139 = por %p137, %p138
      %p140 = scmp.ne.s32.totalorder %s129, %s132
      %p141 = scmp.eq.s32.totalorder %s32, 1
      %p142 = por %p140, %p141
      %p143 = scmp.ne.s32.totalorder %s132, %s133
      %p144 = scmp.eq.s32.totalorder %s32, 0
      %p145 = por %p143, %p144
      %p146 = scmp.ne.s32.totalorder %s132, %s133
      %p147 = scmp.eq.s32.totalorder %s33, 1
      %p148 = por %p146, %p147
      %p150 = scmp.ne.s32.totalorder %s133, %s149
      %p151 = scmp.eq.s32.totalorder %s33, 0
      %p152 = por %p150, %p151
      %s154 = sadd.s32 %s153, 1
      %p157 = scmp.eq.s32.totalorder %s27, 1
      %p158 = scmp.ne.s32.totalorder %s153, %s155
      %p159 = scmp.eq.s32.totalorder %s27, 0
      %p160 = por %p158, %p159
      %p161 = scmp.ne.s32.totalorder %s153, %s155
      %p162 = scmp.eq.s32.totalorder %s32, 1
      %p163 = por %p161, %p162
      %p164 = scmp.ne.s32.totalorder %s155, %s156
      %p165 = scmp.eq.s32.totalorder %s32, 0
      %p166 = por %p164, %p165
      %p167 = scmp.ne.s32.totalorder %s155, %s156
      %p168 = scmp.eq.s32.totalorder %s33, 1
      %p169 = por %p167, %p168
      %p171 = scmp.ne.s32.totalorder %s156, %s170
      %p172 = scmp.eq.s32.totalorder %s33, 0
      %p173 = por %p171, %p172
      %s175 = sadd.s32 %s174, 1
      %p178 = scmp.eq.s32.totalorder %s27, 1
      %p179 = scmp.ne.s32.totalorder %s174, %s176
      %p180 = scmp.eq.s32.totalorder %s27, 0
      %p181 = por %p179, %p180
      %p182 = scmp.ne.s32.totalorder %s174, %s176
      %p183 = scmp.eq.s32.totalorder %s32, 1
      %p184 = por %p182, %p183
      %p185 = scmp.ne.s32.totalorder %s176, %s177
      %p186 = scmp.eq.s32.totalorder %s32, 0
      %p187 = por %p185, %p186
      %p188 = scmp.ne.s32.totalorder %s176, %s177
      %p189 = scmp.eq.s32.totalorder %s33, 1
      %p190 = por %p188, %p189
      %p192 = scmp.ne.s32.totalorder %s177, %s191
      %p193 = scmp.eq.s32.totalorder %s33, 0
      %p194 = por %p192, %p193
      %s195 = ssub.s32 %s34, %s46
      %s196 = ssub.s32 %s35, %s42
      %s197 = sor.u32 %s195, %s196
      %p198 = scmp.eq.s32.totalorder %s197, 0
      %s200 = sadd.s32 %s199, 1
      %s201 = scalar_select %p198, %s199, %s200
      %p204 = pneg %p198
      %p205 = scmp.eq.s32.totalorder %s27, 1
      %p206 = por %p204, %p205
      %p207 = scmp.ne.s32.totalorder %s199, %s202
      %p208 = scmp.eq.s32.totalorder %s27, 0
      %p209 = por %p207, %p208
      %p210 = scmp.ne.s32.totalorder %s199, %s202
      %p211 = scmp.eq.s32.totalorder %s32, 1
      %p212 = por %p210, %p211
      %p213 = scmp.ne.s32.totalorder %s202, %s203
      %p214 = scmp.eq.s32.totalorder %s32, 0
      %p215 = por %p213, %p214
      %p216 = scmp.ne.s32.totalorder %s202, %s203
      %p217 = scmp.eq.s32.totalorder %s33, 1
      %p218 = por %p216, %p217
      %p220 = scmp.ne.s32.totalorder %s203, %s219
      %p221 = scmp.eq.s32.totalorder %s33, 0
      %p222 = por %p220, %p221
      %s223 = ssub.s32 %s34, %s46
      %s224 = ssub.s32 %s35, %s42
      %s225 = sor.u32 %s223, %s224
      %p226 = scmp.eq.s32.totalorder %s225, 0
      %s228 = sadd.s32 %s227, 1
      %s229 = scalar_select %p226, %s227, %s228
      %p232 = pneg %p226
      %p233 = scmp.eq.s32.totalorder %s27, 1
      %p234 = por %p232, %p233
      %p235 = scmp.ne.s32.totalorder %s227, %s230
      %p236 = scmp.eq.s32.totalorder %s27, 0
      %p237 = por %p235, %p236
      %p238 = scmp.ne.s32.totalorder %s227, %s230
      %p239 = scmp.eq.s32.totalorder %s32, 1
      %p240 = por %p238, %p239
      %p241 = scmp.ne.s32.totalorder %s230, %s231
      %p242 = scmp.eq.s32.totalorder %s32, 0
      %p243 = por %p241, %p242
      %p244 = scmp.ne.s32.totalorder %s230, %s231
      %p245 = scmp.eq.s32.totalorder %s33, 1
      %p246 = por %p244, %p245
      %p248 = scmp.ne.s32.totalorder %s231, %s247
      %p249 = scmp.eq.s32.totalorder %s33, 0
      %p250 = por %p248, %p249
      %p251 = scmp.le.s32.totalorder 1, %s27
      %p252 = scmp.lt.s32.totalorder %s27, 3
      %p253 = pnand %p251, %p252
      %p254 = pneg %p253
      // Predicated region
      $region9: #{tpu_custom_call.1} parent=5 // pred_check
        _
      $region10: #{tpu_custom_call.1} parent=5 // pred_check_branch
        %256 = sbr.rel (%p253) target = $region12
      $region11: #{tpu_custom_call.1} parent=5 // pred_region
        %s257 = ssub.s32 %s27, 1
        // Predicated region
        $region13: #{tpu_custom_call.1} parent=11 // pred_check
          %p258 = pneg %p166
        $region14: #{tpu_custom_call.1} parent=11 // pred_check_branch
          %260 = sbr.rel (%p258) target = $region16
        $region15: #{tpu_custom_call.1} parent=11 // pred_region
          %s262 = ssub.s32 1024, 1024
          %263 = vsyncadd [#allocation9], %s262
          %s264 = sshll.u32 [#allocation8], 4
          %s265 = int_to_ptr.vmem [resolvable:$true] %s264
          %270 = dma.hbm_to_vmem [thread:$0]  %s4, 1024, %s265, [#allocation9], 64, 64, 4
        $region16: #{tpu_custom_call.1} parent=11 // pred_fallthru
          _
        // Predicated region
        $region17: #{tpu_custom_call.1} parent=11 // pred_check
          %p271 = pneg %p187
        $region18: #{tpu_custom_call.1} parent=11 // pred_check_branch
          %273 = sbr.rel (%p271) target = $region20
        $region19: #{tpu_custom_call.1} parent=11 // pred_region
          _
        $region20: #{tpu_custom_call.1} parent=11 // pred_fallthru
          _
      $region12: #{tpu_custom_call.1} parent=5 // pred_fallthru
        _
      %p274 = scmp.lt.s32.totalorder %s27, 2
      // Predicated region
      $region21: #{tpu_custom_call.1} parent=5 // pred_check
        %p275 = pneg %p274
      $region22: #{tpu_custom_call.1} parent=5 // pred_check_branch
        %277 = sbr.rel (%p275) target = $region24
      $region23: #{tpu_custom_call.1} parent=5 // pred_region
        // Predicated region
        $region25: #{tpu_custom_call.1} parent=23 // pred_check
          %p278 = pneg %p61
        $region26: #{tpu_custom_call.1} parent=23 // pred_check_branch
          %280 = sbr.rel (%p278) target = $region28
        $region27: #{tpu_custom_call.1} parent=23 // pred_region
          %s281 = sand.u32 %s51, 1
          %s282 = scalar_lea.sflag [#allocation3], %s281
          %s283 = sand.u32 %s51, 1
          %s284 = smul.addr %s283, 4
          %s285 = scalar_lea.vmem [#allocation2], %s284
          %s287 = ssub.s32 64, 64
          %288 = vsyncadd %s282, %s287
          %s289 = sadd.s32 %s35, %s34
          %s290 = smul.addr %s289, 64
          %s291 = scalar_lea.hbm %s0, %s290
          %s293 = sshll.u32 %s285, 4
          %s294 = int_to_ptr.vmem [resolvable:$true] %s293
          %296 = dma.hbm_to_vmem [thread:$0]  %s291, 64, %s294, %s282
        $region28: #{tpu_custom_call.1} parent=23 // pred_fallthru
          _
        // Predicated region
        $region29: #{tpu_custom_call.1} parent=23 // pred_check
          %p297 = pneg %p87
        $region30: #{tpu_custom_call.1} parent=23 // pred_check_branch
          %299 = sbr.rel (%p297) target = $region32
        $region31: #{tpu_custom_call.1} parent=23 // pred_region
          %s300 = sand.u32 %s27, 1
          %s301 = scalar_lea.sflag [#allocation6], %s300
          %s302 = sand.u32 %s77, 1
          %s303 = smul.addr %s302, 64
          %s304 = scalar_lea.vmem [#allocation5], %s303
          %s306 = ssub.s32 1024, 1024
          %307 = vsyncadd %s301, %s306
          %s308 = smul.addr %s34, 16
          %s309 = smul.addr %s308, 64
          %s310 = scalar_lea.hbm %s1, %s309
          %s311 = sshll.u32 %s304, 4
          %s312 = int_to_ptr.vmem [resolvable:$true] %s311
          %317 = dma.hbm_to_vmem [thread:$0]  %s310, 1024, %s312, %s301, 64, 64, 4
        $region32: #{tpu_custom_call.1} parent=23 // pred_fallthru
          _
        // Predicated region
        $region33: #{tpu_custom_call.1} parent=23 // pred_check
          %p318 = pneg %p113
        $region34: #{tpu_custom_call.1} parent=23 // pred_check_branch
          %320 = sbr.rel (%p318) target = $region36
        $region35: #{tpu_custom_call.1} parent=23 // pred_region
          %s321 = sand.u32 %s27, 1
          %s322 = scalar_lea.sflag [#allocation6], %s321
          %s323 = sand.u32 %s103, 1
          %s324 = smul.addr %s323, 64
          %s325 = scalar_lea.vmem [#allocation7], %s324
          %s327 = ssub.s32 1024, 1024
          %328 = vsyncadd %s322, %s327
          %s329 = smul.addr %s34, 16
          %s330 = smul.addr %s329, 64
          %s331 = scalar_lea.hbm %s2, %s330
          %s332 = sshll.u32 %s325, 4
          %s333 = int_to_ptr.vmem [resolvable:$true] %s332
          %338 = dma.hbm_to_vmem [thread:$0]  %s331, 1024, %s333, %s322, 64, 64, 4
        $region36: #{tpu_custom_call.1} parent=23 // pred_fallthru
          _
        // Predicated region
        $region37: #{tpu_custom_call.1} parent=23 // pred_check
          %p339 = pneg %p139
        $region38: #{tpu_custom_call.1} parent=23 // pred_check_branch
          %341 = sbr.rel (%p339) target = $region40
        $region39: #{tpu_custom_call.1} parent=23 // pred_region
          %p342 = scmp.lt.s32.totalorder %s34, 1
          %s343 = scalar_select %p342, %s34, 1
          %s344 = scalar_lea.vmem %s3, %s343
        $region40: #{tpu_custom_call.1} parent=23 // pred_fallthru
          _
      $region24: #{tpu_custom_call.1} parent=5 // pred_fallthru
        _
      %p345 = scmp.le.s32.totalorder 1, %s27
      %p346 = scmp.lt.s32.totalorder %s27, 3
      %p347 = pnand %p345, %p346
      %p348 = pneg %p347
      // Predicated region
      $region41: #{tpu_custom_call.1} parent=5 // pred_check
        _
      $region42: #{tpu_custom_call.1} parent=5 // pred_check_branch
        %350 = sbr.rel (%p347) target = $region44
      $region43: #{tpu_custom_call.1} parent=5 // pred_region
        %s351 = ssub.s32 %s27, 1
        %s352 = sand.u32 %s54, 1
        %s353 = scalar_lea.sflag [#allocation3], %s352
        %s354 = sand.u32 %s54, 1
        %s355 = smul.addr %s354, 4
        %s356 = scalar_lea.vmem [#allocation2], %s355
        // Predicated region
        $region45: #{tpu_custom_call.1} parent=43 // pred_check
          %p357 = pneg %p67
        $region46: #{tpu_custom_call.1} parent=43 // pred_check_branch
          %359 = sbr.rel (%p357) target = $region48
        $region47: #{tpu_custom_call.1} parent=43 // pred_region
          %360 = dma.done %s353, 64
        $region48: #{tpu_custom_call.1} parent=43 // pred_fallthru
          _
        %s361 = sand.u32 %s32, 1
        %s362 = scalar_lea.sflag [#allocation6], %s361
        %s363 = sand.u32 %s80, 1
        %s364 = smul.addr %s363, 64
        %s365 = scalar_lea.vmem [#allocation5], %s364
        // Predicated region
        $region49: #{tpu_custom_call.1} parent=43 // pred_check
          %p366 = pneg %p93
        $region50: #{tpu_custom_call.1} parent=43 // pred_check_branch
          %368 = sbr.rel (%p366) target = $region52
        $region51: #{tpu_custom_call.1} parent=43 // pred_region
          %369 = dma.done %s362, 1024
        $region52: #{tpu_custom_call.1} parent=43 // pred_fallthru
          _
        %s370 = sand.u32 %s32, 1
        %s371 = scalar_lea.sflag [#allocation6], %s370
        %s372 = sand.u32 %s106, 1
        %s373 = smul.addr %s372, 64
        %s374 = scalar_lea.vmem [#allocation7], %s373
        // Predicated region
        $region53: #{tpu_custom_call.1} parent=43 // pred_check
          %p375 = pneg %p119
        $region54: #{tpu_custom_call.1} parent=43 // pred_check_branch
          %377 = sbr.rel (%p375) target = $region56
        $region55: #{tpu_custom_call.1} parent=43 // pred_region
          %378 = dma.done %s371, 1024
        $region56: #{tpu_custom_call.1} parent=43 // pred_fallthru
          _
        // Predicated region
        $region57: #{tpu_custom_call.1} parent=43 // pred_check
          %p379 = pneg %p166
        $region58: #{tpu_custom_call.1} parent=43 // pred_check_branch
          %381 = sbr.rel (%p379) target = $region60
        $region59: #{tpu_custom_call.1} parent=43 // pred_region
          %382 = dma.done [#allocation9], 1024
        $region60: #{tpu_custom_call.1} parent=43 // pred_fallthru
          _
        %s383 = sand.u32 %s54, 1
        %s384 = scalar_lea.sflag [#allocation3], %s383
        %s385 = sand.u32 %s54, 1
        %s386 = smul.addr %s385, 4
        %s387 = scalar_lea.vmem [#allocation2], %s386
        %p388 = pneg %p67
        %p389 = pneg %p64
        %s390 = sand.u32 %s32, 1
        %s391 = scalar_lea.sflag [#allocation6], %s390
        %s392 = sand.u32 %s80, 1
        %s393 = smul.addr %s392, 64
        %s394 = scalar_lea.vmem [#allocation5], %s393
        %p395 = pneg %p93
        %p396 = pneg %p90
        %s397 = sand.u32 %s32, 1
        %s398 = scalar_lea.sflag [#allocation6], %s397
        %s399 = sand.u32 %s106, 1
        %s400 = smul.addr %s399, 64
        %s401 = scalar_lea.vmem [#allocation7], %s400
        %p402 = pneg %p119
        %p403 = pneg %p116
        %p404 = scmp.lt.s32.totalorder %s36, 1
        %s405 = scalar_select %p404, %s36, 1
        %s406 = scalar_lea.vmem %s3, %s405
        %p407 = pneg %p145
        %p408 = pneg %p142
        %p409 = pneg %p166
        %p410 = pneg %p163
        %p411 = pneg %p187
        %p412 = pneg %p184
        %p413 = pneg %p215
        %p414 = pneg %p212
        %s415 = sand.u32 %s202, 1
        %s416 = scalar_lea.sflag [#allocation4], %s415
        %s417 = sand.u32 %s202, 1
        %s418 = smul.addr %s417, 8
        %s419 = scalar_lea.vmem [#allocation10], %s418
        %p420 = pneg %p243
        %p421 = pneg %p240
        %s422 = sand.u32 %s230, 1
        %s423 = scalar_lea.sflag [#allocation12], %s422
        %s424 = sand.u32 %s230, 1
        %s425 = smul.addr %s424, 8
        %s426 = scalar_lea.vmem [#allocation11], %s425
        %p427 = scmp.lt.s32.totalorder %s36, 1
        %s428 = scalar_select %p427, %s36, 1
        %s429 = scalar_lea.vmem %s3, %s428
        %v431 = vld [vmem:[%s356] sm:$0xf]
        %v432 = vld [vmem:[%s365] sm:$0xf]
        %v433 = vld [vmem:[%s365 + $0x4] sm:$0xf]
        %v434 = vld [vmem:[%s365 + $0x8] sm:$0xf]
        %v435 = vld [vmem:[%s365 + $0xc] sm:$0xf]
        %v436 = vld [vmem:[%s365 + $0x10] sm:$0xf]
        %v437 = vld [vmem:[%s365 + $0x14] sm:$0xf]
        %v438 = vld [vmem:[%s365 + $0x18] sm:$0xf]
        %v439 = vld [vmem:[%s365 + $0x1c] sm:$0xf]
        %v440 = vld [vmem:[%s365 + $0x20] sm:$0xf]
        %v441 = vld [vmem:[%s365 + $0x24] sm:$0xf]
        %v442 = vld [vmem:[%s365 + $0x28] sm:$0xf]
        %v443 = vld [vmem:[%s365 + $0x2c] sm:$0xf]
        %v444 = vld [vmem:[%s365 + $0x30] sm:$0xf]
        %v445 = vld [vmem:[%s365 + $0x34] sm:$0xf]
        %v446 = vld [vmem:[%s365 + $0x38] sm:$0xf]
        %v447 = vld [vmem:[%s365 + $0x3c] sm:$0xf]
        %v448 = vld [vmem:[%s374] sm:$0xf]
        %v449 = vld [vmem:[%s374 + $0x4] sm:$0xf]
        %v450 = vld [vmem:[%s374 + $0x8] sm:$0xf]
        %v451 = vld [vmem:[%s374 + $0xc] sm:$0xf]
        %v452 = vld [vmem:[%s374 + $0x10] sm:$0xf]
        %v453 = vld [vmem:[%s374 + $0x14] sm:$0xf]
        %v454 = vld [vmem:[%s374 + $0x18] sm:$0xf]
        %v455 = vld [vmem:[%s374 + $0x1c] sm:$0xf]
        %v456 = vld [vmem:[%s374 + $0x20] sm:$0xf]
        %v457 = vld [vmem:[%s374 + $0x24] sm:$0xf]
        %v458 = vld [vmem:[%s374 + $0x28] sm:$0xf]
        %v459 = vld [vmem:[%s374 + $0x2c] sm:$0xf]
        %v460 = vld [vmem:[%s374 + $0x30] sm:$0xf]
        %v461 = vld [vmem:[%s374 + $0x34] sm:$0xf]
        %v462 = vld [vmem:[%s374 + $0x38] sm:$0xf]
        %v463 = vld [vmem:[%s374 + $0x3c] sm:$0xf]
        %v464 = vld [vmem:[%s429] sm:$0x1]
        %v465 = vld [vmem:[#allocation8] sm:$0xf]
        %v466 = vld [vmem:[#allocation8 + $0x4] sm:$0xf]
        %v467 = vld [vmem:[#allocation8 + $0x8] sm:$0xf]
        %v468 = vld [vmem:[#allocation8 + $0xc] sm:$0xf]
        %v469 = vld [vmem:[#allocation8 + $0x10] sm:$0xf]
        %v470 = vld [vmem:[#allocation8 + $0x14] sm:$0xf]
        %v471 = vld [vmem:[#allocation8 + $0x18] sm:$0xf]
        %v472 = vld [vmem:[#allocation8 + $0x1c] sm:$0xf]
        %v473 = vld [vmem:[#allocation8 + $0x20] sm:$0xf]
        %v474 = vld [vmem:[#allocation8 + $0x24] sm:$0xf]
        %v475 = vld [vmem:[#allocation8 + $0x28] sm:$0xf]
        %v476 = vld [vmem:[#allocation8 + $0x2c] sm:$0xf]
        %v477 = vld [vmem:[#allocation8 + $0x30] sm:$0xf]
        %v478 = vld [vmem:[#allocation8 + $0x34] sm:$0xf]
        %v479 = vld [vmem:[#allocation8 + $0x38] sm:$0xf]
        %v480 = vld [vmem:[#allocation8 + $0x3c] sm:$0xf]
        %v481 = vld [vmem:[%s5] sm:$0x1]
        %v483 = vlaneseq
        %v484 = vshrl.u32 %v483, 7
        %v485 = vsub.s32 0, %v484
        %v486 = vrot.slane %v481, %v485
        %v504 = vunpack.c.l.b16 %v465
        %v505 = vunpack.c.l.b16 %v466
        %v506 = vunpack.c.l.b16 %v467
        %v507 = vunpack.c.l.b16 %v468
        %v508 = vunpack.c.l.b16 %v469
        %v509 = vunpack.c.l.b16 %v470
        %v510 = vunpack.c.l.b16 %v471
        %v511 = vunpack.c.l.b16 %v472
        %v512 = vunpack.c.l.b16 %v473
        %v513 = vunpack.c.l.b16 %v474
        %v514 = vunpack.c.l.b16 %v475
        %v515 = vunpack.c.l.b16 %v476
        %v516 = vunpack.c.l.b16 %v477
        %v517 = vunpack.c.l.b16 %v478
        %v518 = vunpack.c.l.b16 %v479
        %v519 = vunpack.c.l.b16 %v480
        %v520 = vpack.c.b16 %v505, %v504
        %v521 = vpack.c.b16 %v507, %v506
        %v522 = vpack.c.b16 %v509, %v508
        %v523 = vpack.c.b16 %v511, %v510
        %v524 = vpack.c.b16 %v513, %v512
        %v525 = vpack.c.b16 %v515, %v514
        %v526 = vpack.c.b16 %v517, %v516
        %v527 = vpack.c.b16 %v519, %v518
        %536 = vmatprep.subr.bf16.mxu0 0
        %537 = vmatpush1.bf16.msra.mxu0 %v520
        %538 = vmatprep.subr.bf16.mxu0 0
        %539 = vmatpush1.bf16.msra.mxu0 %v521
        %540 = vmatprep.subr.bf16.mxu0 0
        %541 = vmatpush1.bf16.msra.mxu0 %v522
        %542 = vmatprep.subr.bf16.mxu0 0
        %543 = vmatpush1.bf16.msra.mxu0 %v523
        %544 = vmatprep.subr.bf16.mxu0 0
        %545 = vmatpush1.bf16.msra.mxu0 %v524
        %546 = vmatprep.subr.bf16.mxu0 0
        %547 = vmatpush1.bf16.msra.mxu0 %v525
        %548 = vmatprep.subr.bf16.mxu0 0
        %549 = vmatpush1.bf16.msra.mxu0 %v526
        %550 = vmatprep.subr.bf16.mxu0 0
        %551 = vmatpush1.bf16.msra.mxu0 %v527
        %552 = vmatprep.subr.bf16.mxu0 0
        %553 = vmatpush1.bf16.msra.mxu0 0
        %554 = vmatprep.subr.bf16.mxu0 0
        %555 = vmatpush1.bf16.msra.mxu0 0
        %556 = vmatprep.subr.bf16.mxu0 0
        %557 = vmatpush1.bf16.msra.mxu0 0
        %558 = vmatprep.subr.bf16.mxu0 0
        %559 = vmatpush1.bf16.msra.mxu0 0
        %560 = vmatprep.subr.bf16.mxu0 0
        %561 = vmatpush1.bf16.msra.mxu0 0
        %562 = vmatprep.subr.bf16.mxu0 0
        %563 = vmatpush1.bf16.msra.mxu0 0
        %564 = vmatprep.subr.bf16.mxu0 0
        %565 = vmatpush1.bf16.msra.mxu0 0
        %566 = vmatprep.subr.bf16.mxu0 0
        %567 = vmatpush1.bf16.msra.mxu0 0
        %568 = vmatprep.mubr.bf16.mxu0 0
        %569 = vmatmul.mubr.bf16.gmra.mrb[0].mxu0 %v431
        %v570 = vpop.f32.mrb[0].mxu0
        %v571 = vadd.f32 %v486, %v570
        %v572 = vpop.f32.mrb[0].mxu0
        %v573 = vpop.f32.mrb[0].mxu0
        %v574 = vpop.f32.mrb[0].mxu0
        %575 = vdwg.mxu0
        %v576 = vmax.f32 %v571, 0.0
        %v577 = vpack.c.bf16 %v576, %v576
        %v579 = vlaneseq
        %v580 = vshrl.u32 %v579, 7
        %v581 = vsub.s32 0, %v580
        %v582 = vrot.slane %v464, %v581
        %v600 = vunpack.c.l.b16 %v432
        %v601 = vunpack.c.l.b16 %v433
        %v602 = vunpack.c.l.b16 %v434
        %v603 = vunpack.c.l.b16 %v435
        %v604 = vunpack.c.l.b16 %v436
        %v605 = vunpack.c.l.b16 %v437
        %v606 = vunpack.c.l.b16 %v438
        %v607 = vunpack.c.l.b16 %v439
        %v608 = vunpack.c.l.b16 %v440
        %v609 = vunpack.c.l.b16 %v441
        %v610 = vunpack.c.l.b16 %v442
        %v611 = vunpack.c.l.b16 %v443
        %v612 = vunpack.c.l.b16 %v444
        %v613 = vunpack.c.l.b16 %v445
        %v614 = vunpack.c.l.b16 %v446
        %v615 = vunpack.c.l.b16 %v447
        %v616 = vpack.c.b16 %v601, %v600
        %v617 = vpack.c.b16 %v603, %v602
        %v618 = vpack.c.b16 %v605, %v604
        %v619 = vpack.c.b16 %v607, %v606
        %v620 = vpack.c.b16 %v609, %v608
        %v621 = vpack.c.b16 %v611, %v610
        %v622 = vpack.c.b16 %v613, %v612
        %v623 = vpack.c.b16 %v615, %v614
        %632 = vmatprep.subr.bf16.mxu0 0
        %633 = vmatpush1.bf16.xpose.msra.mxu0 %v616
        %634 = vmatprep.subr.bf16.mxu0 0
        %635 = vmatpush1.bf16.xpose.msra.mxu0 %v617
        %636 = vmatprep.subr.bf16.mxu0 0
        %637 = vmatpush1.bf16.xpose.msra.mxu0 %v618
        %638 = vmatprep.subr.bf16.mxu0 0
        %639 = vmatpush1.bf16.xpose.msra.mxu0 %v619
        %640 = vmatprep.subr.bf16.mxu0 0
        %641 = vmatpush1.bf16.xpose.msra.mxu0 %v620
        %642 = vmatprep.subr.bf16.mxu0 0
        %643 = vmatpush1.bf16.xpose.msra.mxu0 %v621
        %644 = vmatprep.subr.bf16.mxu0 0
        %645 = vmatpush1.bf16.xpose.msra.mxu0 %v622
        %646 = vmatprep.subr.bf16.mxu0 0
        %647 = vmatpush1.bf16.xpose.msra.mxu0 %v623
        %648 = vmatprep.subr.bf16.mxu0 0
        %649 = vmatpush1.bf16.xpose.msra.mxu0 0
        %650 = vmatprep.subr.bf16.mxu0 0
        %651 = vmatpush1.bf16.xpose.msra.mxu0 0
        %652 = vmatprep.subr.bf16.mxu0 0
        %653 = vmatpush1.bf16.xpose.msra.mxu0 0
        %654 = vmatprep.subr.bf16.mxu0 0
        %655 = vmatpush1.bf16.xpose.msra.mxu0 0
        %656 = vmatprep.subr.bf16.mxu0 0
        %657 = vmatpush1.bf16.xpose.msra.mxu0 0
        %658 = vmatprep.subr.bf16.mxu0 0
        %659 = vmatpush1.bf16.xpose.msra.mxu0 0
        %660 = vmatprep.subr.bf16.mxu0 0
        %661 = vmatpush1.bf16.xpose.msra.mxu0 0
        %662 = vmatprep.subr.bf16.mxu0 0
        %663 = vmatpush1.bf16.xpose.msra.mxu0 0
        %664 = vmatprep.mubr.bf16.mxu0 0
        %665 = vmatmul.mubr.bf16.gmra.mrb[0].mxu0 %v577
        %v666 = vpop.f32.mrb[0].mxu0
        %v667 = vadd.f32 %v582, %v666
        %v668 = vpop.f32.mrb[0].mxu0
        %v669 = vpop.f32.mrb[0].mxu0
        %v670 = vpop.f32.mrb[0].mxu0
        %671 = vdwg.mxu0
        %672 = vmax.xlane.f32.xlu0 %v667
        %v673 = vpop.xlane.xlu0 %672
        %v674 = vsub.f32 %v667, %v673
        %v675 = vmul.f32 %v674, 1.442695
        %v676 = vpow.pop %v675
        %677 = vadd.xlane.f32.xlu0 %v676
        %v678 = vpop.xlane.xlu0 %677
        %v679 = vrcp.pop %v678
        %v680 = vmul.f32 %v676, %v679
        %681 = vst [vmem:[%s426] sm:$0xff] %v680
        %v682 = vpack.c.bf16 %v680, %v680
        %v699 = vunpack.c.l.b16 %v448
        %v700 = vunpack.c.l.b16 %v449
        %v701 = vunpack.c.l.b16 %v450
        %v702 = vunpack.c.l.b16 %v451
        %v703 = vunpack.c.l.b16 %v452
        %v704 = vunpack.c.l.b16 %v453
        %v705 = vunpack.c.l.b16 %v454
        %v706 = vunpack.c.l.b16 %v455
        %v707 = vunpack.c.l.b16 %v456
        %v708 = vunpack.c.l.b16 %v457
        %v709 = vunpack.c.l.b16 %v458
        %v710 = vunpack.c.l.b16 %v459
        %v711 = vunpack.c.l.b16 %v460
        %v712 = vunpack.c.l.b16 %v461
        %v713 = vunpack.c.l.b16 %v462
        %v714 = vunpack.c.l.b16 %v463
        %v715 = vpack.c.b16 %v700, %v699
        %v716 = vpack.c.b16 %v702, %v701
        %v717 = vpack.c.b16 %v704, %v703
        %v718 = vpack.c.b16 %v706, %v705
        %v719 = vpack.c.b16 %v708, %v707
        %v720 = vpack.c.b16 %v710, %v709
        %v721 = vpack.c.b16 %v712, %v711
        %v722 = vpack.c.b16 %v714, %v713
        %731 = vmatprep.subr.bf16.mxu0 0
        %732 = vmatpush1.bf16.msra.mxu0 %v715
        %733 = vmatprep.subr.bf16.mxu0 0
        %734 = vmatpush1.bf16.msra.mxu0 %v716
        %735 = vmatprep.subr.bf16.mxu0 0
        %736 = vmatpush1.bf16.msra.mxu0 %v717
        %737 = vmatprep.subr.bf16.mxu0 0
        %738 = vmatpush1.bf16.msra.mxu0 %v718
        %739 = vmatprep.subr.bf16.mxu0 0
        %740 = vmatpush1.bf16.msra.mxu0 %v719
        %741 = vmatprep.subr.bf16.mxu0 0
        %742 = vmatpush1.bf16.msra.mxu0 %v720
        %743 = vmatprep.subr.bf16.mxu0 0
        %744 = vmatpush1.bf16.msra.mxu0 %v721
        %745 = vmatprep.subr.bf16.mxu0 0
        %746 = vmatpush1.bf16.msra.mxu0 %v722
        %747 = vmatprep.subr.bf16.mxu0 0
        %748 = vmatpush1.bf16.msra.mxu0 0
        %749 = vmatprep.subr.bf16.mxu0 0
        %750 = vmatpush1.bf16.msra.mxu0 0
        %751 = vmatprep.subr.bf16.mxu0 0
        %752 = vmatpush1.bf16.msra.mxu0 0
        %753 = vmatprep.subr.bf16.mxu0 0
        %754 = vmatpush1.bf16.msra.mxu0 0
        %755 = vmatprep.subr.bf16.mxu0 0
        %756 = vmatpush1.bf16.msra.mxu0 0
        %757 = vmatprep.subr.bf16.mxu0 0
        %758 = vmatpush1.bf16.msra.mxu0 0
        %759 = vmatprep.subr.bf16.mxu0 0
        %760 = vmatpush1.bf16.msra.mxu0 0
        %761 = vmatprep.subr.bf16.mxu0 0
        %762 = vmatpush1.bf16.msra.mxu0 0
        %763 = vmatprep.mubr.bf16.mxu0 0
        %764 = vmatmul.mubr.bf16.gmra.mrb[0].mxu0 %v682
        %v765 = vpop.f32.mrb[0].mxu0
        %v766 = vadd.f32 0.0, %v765
        %v767 = vpop.f32.mrb[0].mxu0
        %v768 = vpop.f32.mrb[0].mxu0
        %v769 = vpop.f32.mrb[0].mxu0
        %770 = vdwg.mxu0
        %771 = vst [vmem:[%s419] sm:$0xff] %v766
        %s772 = sand.u32 %s202, 1
        %s773 = scalar_lea.sflag [#allocation4], %s772
        %s774 = sand.u32 %s202, 1
        %s775 = smul.addr %s774, 8
        %s776 = scalar_lea.vmem [#allocation10], %s775
        %s777 = sand.u32 %s230, 1
        %s778 = scalar_lea.sflag [#allocation12], %s777
        %s779 = sand.u32 %s230, 1
        %s780 = smul.addr %s779, 8
        %s781 = scalar_lea.vmem [#allocation11], %s780
        // Predicated region
        $region61: #{tpu_custom_call.1} parent=43 // pred_check
          %p782 = pneg %p212
        $region62: #{tpu_custom_call.1} parent=43 // pred_check_branch
          %784 = sbr.rel (%p782) target = $region64
        $region63: #{tpu_custom_call.1} parent=43 // pred_region
          %s786 = ssub.s32 128, 128
          %787 = vsyncadd %s773, %s786
          %s788 = sadd.s32 %s37, %s36
          %s789 = smul.addr %s788, 128
          %s790 = scalar_lea.hbm %s6, %s789
          %s792 = sshll.u32 %s776, 4
          %s793 = int_to_ptr.vmem [resolvable:$true] %s792
          %795 = dma.vmem_to_hbm [thread:$0]  %s793, 128, %s790, %s773
        $region64: #{tpu_custom_call.1} parent=43 // pred_fallthru
          _
        // Predicated region
        $region65: #{tpu_custom_call.1} parent=43 // pred_check
          %p796 = pneg %p240
        $region66: #{tpu_custom_call.1} parent=43 // pred_check_branch
          %798 = sbr.rel (%p796) target = $region68
        $region67: #{tpu_custom_call.1} parent=43 // pred_region
          %s800 = ssub.s32 128, 128
          %801 = vsyncadd %s778, %s800
          %s802 = sadd.s32 %s37, %s36
          %s803 = smul.addr %s802, 128
          %s804 = scalar_lea.hbm %s7, %s803
          %s806 = sshll.u32 %s781, 4
          %s807 = int_to_ptr.vmem [resolvable:$true] %s806
          %809 = dma.vmem_to_hbm [thread:$0]  %s807, 128, %s804, %s778
        $region68: #{tpu_custom_call.1} parent=43 // pred_fallthru
          _
      $region44: #{tpu_custom_call.1} parent=5 // pred_fallthru
        _
      %p810 = scmp.le.s32.totalorder 2, %s27
      // Predicated region
      $region69: #{tpu_custom_call.1} parent=5 // pred_check
        %p811 = pneg %p810
      $region70: #{tpu_custom_call.1} parent=5 // pred_check_branch
        %813 = sbr.rel (%p811) target = $region72
      $region71: #{tpu_custom_call.1} parent=5 // pred_region
        %s814 = ssub.s32 %s27, 2
        // Predicated region
        $region73: #{tpu_custom_call.1} parent=71 // pred_check
          %p815 = pneg %p218
        $region74: #{tpu_custom_call.1} parent=71 // pred_check_branch
          %817 = sbr.rel (%p815) target = $region76
        $region75: #{tpu_custom_call.1} parent=71 // pred_region
          %s818 = sand.u32 %s203, 1
          %s819 = scalar_lea.sflag [#allocation4], %s818
          %s820 = sand.u32 %s203, 1
          %s821 = smul.addr %s820, 8
          %s822 = scalar_lea.vmem [#allocation10], %s821
          %823 = dma.done %s819, 128
        $region76: #{tpu_custom_call.1} parent=71 // pred_fallthru
          _
        // Predicated region
        $region77: #{tpu_custom_call.1} parent=71 // pred_check
          %p824 = pneg %p246
        $region78: #{tpu_custom_call.1} parent=71 // pred_check_branch
          %826 = sbr.rel (%p824) target = $region80
        $region79: #{tpu_custom_call.1} parent=71 // pred_region
          %s827 = sand.u32 %s231, 1
          %s828 = scalar_lea.sflag [#allocation12], %s827
          %s829 = sand.u32 %s231, 1
          %s830 = smul.addr %s829, 8
          %s831 = scalar_lea.vmem [#allocation11], %s830
          %832 = dma.done %s828, 128
        $region80: #{tpu_custom_call.1} parent=71 // pred_fallthru
          _
      $region72: #{tpu_custom_call.1} parent=5 // pred_fallthru
        _
    $region6: #{tpu_custom_call.1} parent=1 // loop_footer
      %s31 = sadd.s32 1, %s27
    $region7: #{tpu_custom_call.1} parent=1 // loop_footer_branch
      %26 = sbr.rel target = $region3
    $region8: #{tpu_custom_call.1} parent=1 // loop_exit
      _
    %833 = vsyncpa [#allocation3], 1
    %s834 = scalar_lea.sflag [#allocation3], 1
    %835 = vsyncpa %s834, 1
    %836 = vsyncpa [#allocation6], 1
    %s837 = scalar_lea.sflag [#allocation6], 1
    %838 = vsyncpa %s837, 1
    %839 = vsyncpa [#allocation9], 1
    %840 = vsyncpa [#allocation4], 1
    %s841 = scalar_lea.sflag [#allocation4], 1
    %842 = vsyncpa %s841, 1
    %843 = vsyncpa [#allocation12], 1
    %s844 = scalar_lea.sflag [#allocation12], 1
    %845 = vsyncpa %s844, 1

</llo_original>
